<compile_context>
chip_gen: v7x
topology: tpu7x:2x2x1
jax: 0.10.0
libtpu: 0.0.40
codegen_flags: <defaults>
</compile_context>

<pallas_src>
import jax
import jax.numpy as jnp
from jax.experimental import pallas as pl
from jax.experimental.pallas import tpu as pltpu

_EPS = 1e-12          # matches the module's l2_normalize (clamps the SQUARED sum)


def _round_up(n, m):
    return ((n + m - 1) // m) * m


# ---------------------------------------------------------------------------
# Kernel A (single step, tiny): normalise prompt_key & task_rep, task_sim.
# ---------------------------------------------------------------------------
def _key_task_kernel(key_ref, task_ref, knorm_ref, tsim_ref):
    k = key_ref[...].astype(jnp.float32)
    ksq = jnp.sum(k * k, axis=-1, keepdims=True)
    k_norm = k * jax.lax.rsqrt(jnp.maximum(ksq, _EPS))            # (P, D)
    knorm_ref[...] = k_norm

    t = task_ref[...].astype(jnp.float32)
    tsq = jnp.sum(t * t, axis=-1, keepdims=True)
    # PyTorch does task_rep / task_rep.norm(...) with NO eps clamp.
    t_norm = t * jax.lax.rsqrt(tsq)                               # (T, D)
    tsim_ref[...] = jax.lax.dot_general(
        t_norm, k_norm,
        dimension_numbers=(((1,), (1,)), ((), ())),
        preferred_element_type=jnp.float32)                       # (T, P)


def run_key_task_kernel(prompt_key, task_rep):
    """Returns (prompt_key_norm (P,D) f32, task_sim (T,P) f32)."""
    P, D = prompt_key.shape
    T = task_rep.shape[0]
    return pl.pallas_call(
        _key_task_kernel,
        out_shape=(jax.ShapeDtypeStruct((P, D), jnp.float32),
                   jax.ShapeDtypeStruct((T, P), jnp.float32)),
    )(prompt_key, task_rep)


# ---------------------------------------------------------------------------
# Kernel B (batch-gridded): seq-mean, l2-normalise x, similarity matmul.
# ---------------------------------------------------------------------------
def _make_sim_kernel(inv_seq):
    def kernel(x_ref, knorm_ref, sim_ref, xnorm_ref):
        # x_ref: (tb, S, D) in native dtype; cast after load (bf16 streaming).
        x = x_ref[...].astype(jnp.float32)
        # Seq-mean as a sublane-axis sum scaled by a precomputed 1/S.
        # TODO(synk): if a bundle dump shows this kernel VPU/XLU-bound (not
        # DMA-bound), reformulate the reduction as an MXU ones-matmul.
        x_mean = jnp.sum(x, axis=1) * inv_seq                      # (tb, D)

        xsq = jnp.sum(x_mean * x_mean, axis=-1, keepdims=True)
        x_norm = x_mean * jax.lax.rsqrt(jnp.maximum(xsq, _EPS))    # (tb, D)
        xnorm_ref[...] = x_norm

        # similarity = x_norm @ key_norm.T   (== PyTorch (K @ X.T).T)
        sim_ref[...] = jax.lax.dot_general(
            x_norm, knorm_ref[...],
            dimension_numbers=(((1,), (1,)), ((), ())),
            preferred_element_type=jnp.float32)                    # (tb, P)
    return kernel


def _choose_batch_tile(B, S, D, itemsize, x_budget_bytes=24 << 20):
    """Pick a batch tile: multiple of 8, double-buffered x tile <= budget.

    Budget of ~24 MiB for the x double-buffer keeps the total comfortably
    inside v7x's 64 MiB physical VMEM; v5e/v6e have 128 MiB.
    """
    if B <= 8:
        return B                    # one full block, no padding rows at all
    per_row = 2 * S * D * itemsize  # double-buffered bytes per batch row
    tb = min(128, max(8, x_budget_bytes // max(per_row, 1)))
    tb -= tb % 8
    tb = min(tb, _round_up(B, 8))
    return max(tb, 8)


def run_similarity_kernel(x_embed, prompt_key_norm, *, batch_tile=None):
    """Returns (similarity (B,P) f32, x_embed_norm (B,D) f32)."""
    B, S, D = x_embed.shape
    P = prompt_key_norm.shape[0]
    itemsize = jnp.dtype(x_embed.dtype).itemsize
    tb = batch_tile if batch_tile is not None else _choose_batch_tile(
        B, S, D, itemsize)
    grid = (pl.cdiv(B, tb),)

    # Explicit VMEM budget (v5e default scoped limit is only 16 MiB).
    est = (2 * tb * S * D * itemsize       # x double-buffer
           + 2 * P * D * 4                 # k_norm
           + 2 * tb * P * 4                # sim out double-buffer
           + 2 * tb * D * 4)               # x_norm out double-buffer
    vmem_limit = int(min(max(est + (4 << 20), 16 << 20), 64 << 20))

    sim, xnorm = pl.pallas_call(
        _make_sim_kernel(1.0 / S),
        out_shape=(
            jax.ShapeDtypeStruct((B, P), jnp.float32),   # similarity
            jax.ShapeDtypeStruct((B, D), jnp.float32),   # x_embed_norm
        ),
        grid=grid,
        in_specs=[
            # TODO(synk): optionally pipeline_mode=pl.Buffered(3) on x once
            # tb is large, budget permitting.
            pl.BlockSpec((tb, S, D), lambda b: (b, 0, 0)),
            pl.BlockSpec((P, D), lambda b: (0, 0)),
        ],
        out_specs=(
            pl.BlockSpec((tb, P), lambda b: (b, 0)),
            pl.BlockSpec((tb, D), lambda b: (b, 0)),
        ),
        # No constant-block-index outputs left in this kernel, so the batch
        # axis is safely "parallel" (megacore sharding on v7x).
        compiler_params=pltpu.CompilerParams(
            dimension_semantics=("parallel",),
            vmem_limit_bytes=vmem_limit),
    )(x_embed, prompt_key_norm)
    return sim, xnorm


# ---------------------------------------------------------------------------
# Forward (prompt_pool=True, use_prefix_tune_for_e_prompt=True,
#          embedding_key='mean', batchwise_prompt=False).
# ---------------------------------------------------------------------------
def eprompt_lgcl_forward(params, x_embed, task_id=0, prompt_mask=None,
                         top_k=3, neg_key=None):
    prompt = params["prompt"]            # (L, 2, P, length, H, Hd)
    prompt_key = params["prompt_key"]    # (P, D)
    task_rep = params["task_rep"]        # (T, D)
    B = x_embed.shape[0]
    out = {}

    prompt_key_norm, task_sim = run_key_task_kernel(prompt_key, task_rep)
    similarity, x_embed_norm = run_similarity_kernel(x_embed, prompt_key_norm)
    out["similarity"] = similarity

    if prompt_mask is None:
        _, idx = jax.lax.top_k(similarity, top_k)      # (B, K), descending
    else:
        idx = prompt_mask                              # skip wasted top-k work
    out["prompt_idx"] = idx

    # prefix-tune gather + reshape (mirrors PyTorch flat-memory .reshape:
    # (L,2,B,K,Ln,H,Hd) row-major flat -> (L,B,2,K*Ln,H,Hd), no permute).
    batched_prompt_raw = prompt[:, :, idx]             # (L, 2, B, K, Ln, H, Hd)
    L, dual, Bc, K, Ln, H, Hd = batched_prompt_raw.shape
    batched_prompt = batched_prompt_raw.reshape(L, Bc, dual, K * Ln, H, Hd)

    batched_key_norm = prompt_key_norm[idx]            # (B, K, D)
    out["selected_key"] = batched_key_norm
    out["prompt_key_norm"] = prompt_key_norm
    out["x_embed_norm"] = x_embed_norm

    # Loss terms recovered algebraically from the kernel matmul outputs:
    #   sum(key_norm[idx] * x_norm[:,None,:])     == sum_bk sim[b, idx[b,k]]
    #   sum(key_norm[idx] * task_norm[t][None])   == sum_bk task_sim[t, idx[b,k]]
    sel_sim = jnp.take_along_axis(similarity, idx, axis=1)          # (B, K)
    reduce_sim = jnp.sum(sel_sim) / B
    pos_s = jnp.sum(jnp.take(task_sim[task_id], idx))               # scalar

    if task_id == 0:
        total_loss = 1.0 - pos_s / B
    else:
        # TODO(synk): original uses Python random.randint per batch element;
        # replaced with deterministic jax.random sampling for reproducibility.
        if neg_key is None:
            neg_key = jax.random.PRNGKey(123)
        neg_idx = jax.random.randint(neg_key, (B,), 0, task_id)
        neg_rows = task_sim[neg_idx]                                # (B, P)
        neg_s = jnp.sum(jnp.take_along_axis(neg_rows, idx, axis=1))
        total_loss = 1.0 - pos_s / B + neg_s / B

    out["task_map_loss"] = total_loss
    out["reduce_sim"] = reduce_sim
    out["batched_prompt"] = batched_prompt
    return out


# ---------------------------------------------------------------------------
if __name__ == "__main__":
    # Module config (small): num_layers=1, pool_size=10, length=5, embed_dim=32,
    # num_heads=4, top_k=3, num_tasks=3, batch=2, seq=8.
    L, P, length, D, H = 1, 10, 5, 32, 4
    Hd = D // H
    num_tasks, B, S, top_k = 3, 2, 8, 3

    key = jax.random.PRNGKey(0)
    k1, k2, k3, k4, k5 = jax.random.split(key, 5)

    prompt = jax.random.uniform(k1, (L, 2, P, length, H, Hd),
                                minval=-1.0, maxval=1.0, dtype=jnp.float32)
    prompt_key = jax.random.uniform(k2, (P, D),
                                    minval=-1.0, maxval=1.0, dtype=jnp.float32)
    task_rep = jax.random.uniform(k3, (num_tasks, D),
                                  minval=-1.0, maxval=1.0, dtype=jnp.float32)
    params = {"prompt": prompt, "prompt_key": prompt_key, "task_rep": task_rep}

    x_embed = jax.random.normal(k4, (B, S, D), dtype=jnp.float32)

    out0 = eprompt_lgcl_forward(params, x_embed, task_id=0, top_k=top_k)
    out2 = eprompt_lgcl_forward(params, x_embed, task_id=2, top_k=top_k)
    jax.tree_util.tree_map(jax.block_until_ready, out0)
    jax.tree_util.tree_map(jax.block_until_ready, out2)

    # --- pure-JAX reference ---------------------------------------------------
    def _l2n(v):
        sq = jnp.sum(v * v, axis=-1, keepdims=True)
        return v * jax.lax.rsqrt(jnp.maximum(sq, _EPS))

    def _reference(xe, pk, tr, tk):
        x_mean = jnp.mean(xe.astype(jnp.float32), axis=1)
        xn = _l2n(x_mean)
        kn = _l2n(pk.astype(jnp.float32))
        sim = jnp.dot(xn, kn.T, precision=jax.lax.Precision.HIGHEST)
        _, idxr = jax.lax.top_k(sim, tk)
        bkn = kn[idxr]
        trn = tr / jnp.linalg.norm(tr, axis=-1, keepdims=True)
        return xn, kn, sim, idxr, bkn, trn

    xn_r, kn_r, sim_r, idx_r, bkn_r, tr_r = _reference(
        x_embed, prompt_key, task_rep, top_k)
    pos_r = jnp.sum(bkn_r * tr_r[0][None, None, :])
    reduce_sim_r = jnp.sum(bkn_r * xn_r[:, None, :]) / B
    loss0_r = 1.0 - pos_r / B

    assert out0["batched_prompt"].shape == (L, B, 2, top_k * length, H, Hd)
    assert out0["similarity"].shape == (B, P)
    assert out0["prompt_idx"].shape == (B, top_k)
    assert jnp.allclose(out0["similarity"], sim_r, atol=1e-5, rtol=1e-5)
    assert jnp.allclose(out0["x_embed_norm"], xn_r, atol=1e-5, rtol=1e-5)
    assert jnp.allclose(out0["prompt_key_norm"], kn_r, atol=1e-5, rtol=1e-5)
    assert jnp.allclose(out0["reduce_sim"], reduce_sim_r, atol=1e-5, rtol=1e-5)
    assert jnp.allclose(out0["task_map_loss"], loss0_r, atol=1e-5, rtol=1e-5)
    assert bool(jnp.isfinite(out2["task_map_loss"]))

    # --- bf16 streaming + ragged batch tile (B not a multiple of the tile) ---
    B2 = 9
    x_bf16 = jax.random.normal(k5, (B2, S, D), dtype=jnp.bfloat16)
    out_b = eprompt_lgcl_forward(params, x_bf16, task_id=1, top_k=top_k)
    jax.tree_util.tree_map(jax.block_until_ready, out_b)
    xn_b, kn_b, sim_b, _, _, _ = _reference(x_bf16, prompt_key, task_rep, top_k)
    assert out_b["similarity"].shape == (B2, P)
    assert out_b["x_embed_norm"].shape == (B2, D)
    assert jnp.allclose(out_b["similarity"], sim_b, atol=1e-4, rtol=1e-4)
    assert jnp.allclose(out_b["x_embed_norm"], xn_b, atol=1e-4, rtol=1e-4)
    assert bool(jnp.isfinite(out_b["task_map_loss"]))

    print("KERNEL_OK")
</pallas_src>

<mosaic_0001>
module attributes {stable_mosaic.version = 11 : i64} {
  func.func @_key_task_kernel(%arg0: memref<10x32xf32, #tpu.memory_space<vmem>>, %arg1: memref<3x32xf32, #tpu.memory_space<vmem>>, %arg2: memref<10x32xf32, #tpu.memory_space<vmem>>, %arg3: memref<3x10xf32, #tpu.memory_space<vmem>>) attributes {dimension_semantics = [], scalar_prefetch = 0 : i64, scratch_operands = 0 : i64, tpu.core_type = #tpu.core_type<tc>} {
    %c0 = arith.constant 0 : index
    %c0_0 = arith.constant 0 : index
    %0 = vector.load %arg0[%c0, %c0_0] : memref<10x32xf32, #tpu.memory_space<vmem>>, vector<10x32xf32>
    %1 = arith.mulf %0, %0 : vector<10x32xf32>
    %cst = arith.constant dense<0.000000e+00> : vector<10xf32>
    %2 = vector.multi_reduction <add>, %1, %cst [1] : vector<10x32xf32> to vector<10xf32>
    %3 = vector.shape_cast %2 : vector<10xf32> to vector<10x1xf32>
    %cst_1 = arith.constant 9.99999996E-13 : f32
    %4 = vector.broadcast %cst_1 : f32 to vector<10x1xf32>
    %5 = arith.maximumf %3, %4 : vector<10x1xf32>
    %6 = math.rsqrt %5 : vector<10x1xf32>
    %7 = vector.broadcast %6 : vector<10x1xf32> to vector<10x32xf32>
    %8 = arith.mulf %0, %7 : vector<10x32xf32>
    %c0_2 = arith.constant 0 : index
    %c0_3 = arith.constant 0 : index
    %9 = vector.load %arg2[%c0_2, %c0_3] : memref<10x32xf32, #tpu.memory_space<vmem>>, vector<10x32xf32>
    tpu.vector_store %arg2[%c0_2, %c0_3], %8 {strides = array<i32>} : memref<10x32xf32, #tpu.memory_space<vmem>>, vector<10x32xf32>,
    %c0_4 = arith.constant 0 : index
    %c0_5 = arith.constant 0 : index
    %10 = vector.load %arg1[%c0_4, %c0_5] : memref<3x32xf32, #tpu.memory_space<vmem>>, vector<3x32xf32>
    %11 = arith.mulf %10, %10 : vector<3x32xf32>
    %cst_6 = arith.constant dense<0.000000e+00> : vector<3xf32>
    %12 = vector.multi_reduction <add>, %11, %cst_6 [1] : vector<3x32xf32> to vector<3xf32>
    %13 = vector.shape_cast %12 : vector<3xf32> to vector<3x1xf32>
    %14 = math.rsqrt %13 : vector<3x1xf32>
    %15 = vector.broadcast %14 : vector<3x1xf32> to vector<3x32xf32>
    %16 = arith.mulf %10, %15 : vector<3x32xf32>
    %cst_7 = arith.constant dense<0.000000e+00> : vector<3x10xf32>
    %17 = tpu.matmul %16, %8, %cst_7 {dimension_numbers = #tpu.dot_dimension_numbers<[1], [1], [0], [0], [0, 0, 1, 0], [], []>} : vector<3x32xf32>, vector<10x32xf32>, vector<3x10xf32> -> vector<3x10xf32>
    %c0_8 = arith.constant 0 : index
    %c0_9 = arith.constant 0 : index
    %18 = vector.load %arg3[%c0_8, %c0_9] : memref<3x10xf32, #tpu.memory_space<vmem>>, vector<3x10xf32>
    tpu.vector_store %arg3[%c0_8, %c0_9], %17 {strides = array<i32>} : memref<3x10xf32, #tpu.memory_space<vmem>>, vector<3x10xf32>,
    return
  }
}

</mosaic_0001>

<llo_original>
// kernel: tpu_custom_call.1
$region0: #{tpu_custom_call.1}
  #allocation0 [shape = 'u32[]', space=smem, size = 0x4, offset = 0x4, fixed_abs, tag = 'smem constant byte address 0x4 - core index']
  #allocation1 [shape = 'u32[144,128]{1,0:T(1,128)}', space=vmem, size = 0x12000, scoped, tag = 'internal scratch']
  %s0 = inlined_call_operand.hbm [shape: f32[10,32], index: 0, kind: input, shape index: {}]
  %s1 = inlined_call_operand.hbm [shape: f32[3,32], index: 1, kind: input, shape index: {}]
  %s2 = inlined_call_operand.hbm [shape: f32[10,32], index: 2, kind: output, shape index: {0}]
  %s3 = inlined_call_operand.hbm [shape: f32[3,10], index: 3, kind: output, shape index: {1}]
  %4 = xla_tuple %s2, %s3
  %s5 = sld [smem:[#allocation0]]
  $region34: #{tpu_custom_call.1} parent=0
    _
  %s7 = ssub.s32 1, %s5
  %s8 = scalar_select 0, %s7, %s5
  $region1: #{tpu_custom_call.1} parent=0
    #allocation2 [shape = 'u8[8192]{0}', space=vmem, size = 0x2000, scoped, tag = 'input window, operand 0, single buffered']
    #allocation3 [shape = 's32[1]{0}', space=sflag, size = 0x4, scoped, tag = 'scoped memory for tpu_custom_call.1']
    #allocation4 [shape = 's32[1]{0}', space=sflag, size = 0x4, scoped, tag = 'scoped memory for tpu_custom_call.1']
    #allocation5 [shape = 'u8[2048]{0}', space=vmem, size = 0x800, scoped, tag = 'input window, operand 1, single buffered']
    #allocation6 [shape = 's32[1]{0}', space=sflag, size = 0x4, scoped, tag = 'scoped memory for tpu_custom_call.1']
    #allocation7 [shape = 'u8[8192]{0}', space=vmem, size = 0x2000, scoped, tag = 'output window, operand 0, single buffered']
    #allocation8 [shape = 'u8[2048]{0}', space=vmem, size = 0x800, scoped, tag = 'output window, operand 1, single buffered']
    #allocation9 [shape = 's32[1]{0}', space=sflag, size = 0x4, scoped, tag = 'scoped memory for tpu_custom_call.1']
    %9 = vsyncpa [#allocation3], 0
    %10 = vsyncpa [#allocation6], 0
    %11 = vsyncpa [#allocation4], 0
    %12 = vsyncpa [#allocation9], 0
    // Predicated region
    $region2: #{tpu_custom_call.1} parent=1 // pred_check
      _
    $region3: #{tpu_custom_call.1} parent=1 // pred_check_branch
      %14 = sbr.rel (0) target = $region5
    $region4: #{tpu_custom_call.1} parent=1 // pred_region
      %s16 = ssub.s32 256, 256
      %17 = vsyncadd [#allocation3], %s16
      %s18 = sshll.u32 [#allocation2], 4
      %s19 = int_to_ptr.vmem [resolvable:$true] %s18
      %24 = dma.hbm_to_vmem [thread:$0]  %s0, 256, %s19, [#allocation3], 128, 128, 8
    $region5: #{tpu_custom_call.1} parent=1 // pred_fallthru
      _
    // Predicated region
    $region6: #{tpu_custom_call.1} parent=1 // pred_check
      _
    $region7: #{tpu_custom_call.1} parent=1 // pred_check_branch
      %26 = sbr.rel (0) target = $region9
    $region8: #{tpu_custom_call.1} parent=1 // pred_region
      %s28 = ssub.s32 64, 64
      %29 = vsyncadd [#allocation6], %s28
      %s31 = sshll.u32 [#allocation5], 4
      %s32 = int_to_ptr.vmem [resolvable:$true] %s31
      %34 = dma.hbm_to_vmem [thread:$0]  %s1, 64, %s32, [#allocation6]
    $region9: #{tpu_custom_call.1} parent=1 // pred_fallthru
      _
    // Predicated region
    $region10: #{tpu_custom_call.1} parent=1 // pred_check
      _
    $region11: #{tpu_custom_call.1} parent=1 // pred_check_branch
      %36 = sbr.rel (0) target = $region13
    $region12: #{tpu_custom_call.1} parent=1 // pred_region
      %37 = dma.done [#allocation3], 256
    $region13: #{tpu_custom_call.1} parent=1 // pred_fallthru
      _
    // Predicated region
    $region14: #{tpu_custom_call.1} parent=1 // pred_check
      _
    $region15: #{tpu_custom_call.1} parent=1 // pred_check_branch
      %39 = sbr.rel (0) target = $region17
    $region16: #{tpu_custom_call.1} parent=1 // pred_region
      %40 = dma.done [#allocation6], 64
    $region17: #{tpu_custom_call.1} parent=1 // pred_fallthru
      _
    %v41 = vld [vmem:[#allocation2] sm:$0xff]
    %v42 = vld [vmem:[#allocation2 + $0x8] sm:$0x3]
    %v43 = vmul.f32 %v41, %v41
    %v44 = vmul.f32 %v42, %v42
    %vm45 = vcmask 261120
    %v46 = vsel %vm45, %v43, 0.0
    %47 = vadd.xlane.f32.xlu0 %v46
    %v48 = vpop.xlane.xlu0 %47
    %vm49 = vcmask 254976
    %v50 = vsel %vm49, %v44, 0.0
    %51 = vadd.xlane.f32.xlu0 %v50
    %v52 = vpop.xlane.xlu0 %51
    %v53 = vmax.f32 %v48, 1e-12
    %v54 = vmax.f32 %v52, 1e-12
    %v55 = vrsqrt.pop %v53
    %v56 = vrsqrt.pop %v54
    %v57 = vmul.f32 %v41, %v55
    %v58 = vmul.f32 %v42, %v56
    %59 = vst.msk [vmem:[#allocation7] sm:$0xff] %vm45, %v57
    %60 = vst.msk [vmem:[#allocation7 + $0x8] sm:$0x3] %vm49, %v58
    %v61 = vld [vmem:[#allocation5] sm:$0x7]
    %v62 = vmul.f32 %v61, %v61
    %vm63 = vcmask 256000
    %v64 = vsel %vm63, %v62, 0.0
    %65 = vadd.xlane.f32.xlu0 %v64
    %v66 = vpop.xlane.xlu0 %65
    %v67 = vrsqrt.pop %v66
    %v68 = vmul.f32 %v61, %v67
    %v70 = vsel %vm45, %v68, 0
    %v73 = vsel %vm45, %v57, 0
    %v76 = vsel %vm45, %v58, 0
    %78 = vmatprep.subr.mxu0 0.0
    %79 = vmatpush1.xpose.msra.mxu0 %v73
    %80 = vmatprep.subr.mxu0 0.0
    %81 = vmatpush1.xpose.msra.mxu0 %v76
    %82 = vmatprep.subr.mxu0 0.0
    %83 = vmatpush1.xpose.msra.mxu0 0.0
    %84 = vmatprep.subr.mxu0 0.0
    %85 = vmatpush1.xpose.msra.mxu0 0.0
    %86 = vmatprep.subr.mxu0 0.0
    %87 = vmatpush1.xpose.msra.mxu0 0.0
    %88 = vmatprep.subr.mxu0 0.0
    %89 = vmatpush1.xpose.msra.mxu0 0.0
    %90 = vmatprep.subr.mxu0 0.0
    %91 = vmatpush1.xpose.msra.mxu0 0.0
    %92 = vmatprep.subr.mxu0 0.0
    %93 = vmatpush1.xpose.msra.mxu0 0.0
    %94 = vmatprep.subr.mxu0 0.0
    %95 = vmatpush1.xpose.msra.mxu0 0.0
    %96 = vmatprep.subr.mxu0 0.0
    %97 = vmatpush1.xpose.msra.mxu0 0.0
    %98 = vmatprep.subr.mxu0 0.0
    %99 = vmatpush1.xpose.msra.mxu0 0.0
    %100 = vmatprep.subr.mxu0 0.0
    %101 = vmatpush1.xpose.msra.mxu0 0.0
    %102 = vmatprep.subr.mxu0 0.0
    %103 = vmatpush1.xpose.msra.mxu0 0.0
    %104 = vmatprep.subr.mxu0 0.0
    %105 = vmatpush1.xpose.msra.mxu0 0.0
    %106 = vmatprep.subr.mxu0 0.0
    %107 = vmatpush1.xpose.msra.mxu0 0.0
    %108 = vmatprep.subr.mxu0 0.0
    %109 = vmatpush1.xpose.msra.mxu0 0.0
    %110 = vmatprep.subr.mxu0 0.0
    %111 = vmatpush1.xpose.msra.mxu0 0.0
    %112 = vmatprep.subr.mxu0 0.0
    %113 = vmatpush1.xpose.msra.mxu0 0.0
    %114 = vmatprep.subr.mxu0 0.0
    %115 = vmatpush1.xpose.msra.mxu0 0.0
    %116 = vmatprep.subr.mxu0 0.0
    %117 = vmatpush1.xpose.msra.mxu0 0.0
    %118 = vmatprep.subr.mxu0 0.0
    %119 = vmatpush1.xpose.msra.mxu0 0.0
    %120 = vmatprep.subr.mxu0 0.0
    %121 = vmatpush1.xpose.msra.mxu0 0.0
    %122 = vmatprep.subr.mxu0 0.0
    %123 = vmatpush1.xpose.msra.mxu0 0.0
    %124 = vmatprep.subr.mxu0 0.0
    %125 = vmatpush1.xpose.msra.mxu0 0.0
    %126 = vmatprep.subr.mxu0 0.0
    %127 = vmatpush1.xpose.msra.mxu0 0.0
    %128 = vmatprep.subr.mxu0 0.0
    %129 = vmatpush1.xpose.msra.mxu0 0.0
    %130 = vmatprep.subr.mxu0 0.0
    %131 = vmatpush1.xpose.msra.mxu0 0.0
    %132 = vmatprep.subr.mxu0 0.0
    %133 = vmatpush1.xpose.msra.mxu0 0.0
    %134 = vmatprep.subr.mxu0 0.0
    %135 = vmatpush1.xpose.msra.mxu0 0.0
    %136 = vmatprep.subr.mxu0 0.0
    %137 = vmatpush1.xpose.msra.mxu0 0.0
    %138 = vmatprep.subr.mxu0 0.0
    %139 = vmatpush1.xpose.msra.mxu0 0.0
    %140 = vmatprep.subr.mxu0 0.0
    %141 = vmatpush1.xpose.msra.mxu0 0.0
    %142 = vmatprep.mubr.f32.mxu0 0.0
    %143 = vmatmul.mubr.f32.gmra.mrb[0].mxu0 %v70
    %v144 = vpop.f32.mrb[0].mxu0
    %v145 = vadd.f32 0.0, %v144
    %v146 = vpop.f32.mrb[0].mxu0
    %147 = vdwg.mxu0
    %vm148 = vcmask 75776
    %149 = vst.msk [vmem:[#allocation8] sm:$0x7] %vm148, %v145
    // Predicated region
    $region18: #{tpu_custom_call.1} parent=1 // pred_check
      _
    $region19: #{tpu_custom_call.1} parent=1 // pred_check_branch
      %151 = sbr.rel (0) target = $region21
    $region20: #{tpu_custom_call.1} parent=1 // pred_region
      %s153 = ssub.s32 256, 256
      %154 = vsyncadd [#allocation4], %s153
      %s155 = sshll.u32 [#allocation7], 4
      %s156 = int_to_ptr.vmem [resolvable:$true] %s155
      %161 = dma.vmem_to_hbm [thread:$0]  %s156, 256, %s2, [#allocation4], 128, 128, 8
    $region21: #{tpu_custom_call.1} parent=1 // pred_fallthru
      _
    // Predicated region
    $region22: #{tpu_custom_call.1} parent=1 // pred_check
      _
    $region23: #{tpu_custom_call.1} parent=1 // pred_check_branch
      %163 = sbr.rel (0) target = $region25
    $region24: #{tpu_custom_call.1} parent=1 // pred_region
      %s165 = ssub.s32 64, 64
      %166 = vsyncadd [#allocation9], %s165
      %s168 = sshll.u32 [#allocation8], 4
      %s169 = int_to_ptr.vmem [resolvable:$true] %s168
      %171 = dma.vmem_to_hbm [thread:$0]  %s169, 64, %s3, [#allocation9]
    $region25: #{tpu_custom_call.1} parent=1 // pred_fallthru
      _
    // Predicated region
    $region26: #{tpu_custom_call.1} parent=1 // pred_check
      _
    $region27: #{tpu_custom_call.1} parent=1 // pred_check_branch
      %173 = sbr.rel (0) target = $region29
    $region28: #{tpu_custom_call.1} parent=1 // pred_region
      %174 = dma.done [#allocation4], 256
    $region29: #{tpu_custom_call.1} parent=1 // pred_fallthru
      _
    // Predicated region
    $region30: #{tpu_custom_call.1} parent=1 // pred_check
      _
    $region31: #{tpu_custom_call.1} parent=1 // pred_check_branch
      %176 = sbr.rel (0) target = $region33
    $region32: #{tpu_custom_call.1} parent=1 // pred_region
      %177 = dma.done [#allocation9], 64
    $region33: #{tpu_custom_call.1} parent=1 // pred_fallthru
      _
    %178 = vsyncpa [#allocation3], 1
    %179 = vsyncpa [#allocation6], 1
    %180 = vsyncpa [#allocation4], 1
    %181 = vsyncpa [#allocation9], 1

</llo_original>
